<compile_context>
chip_gen: v7x
topology: tpu7x:2x2x1
jax: 0.10.0
libtpu: 0.0.40
codegen_flags: <defaults>
</compile_context>

<pallas_src>
import jax
import jax.numpy as jnp
from jax.experimental import pallas as pl
from jax.experimental.pallas import tpu as pltpu

EMB_IN = 32        # input embedding dim (global constant in the original module)
HIDDEN = 32        # hidden_units
EMB_OUT = 16       # emb_out


def _round_up(x, m):
    return ((x + m - 1) // m) * m


def _choose_tile(batch, block_rows):
    """Row tile: multiple of 8, capped at block_rows; >=2 grid steps for v7x."""
    tb = min(block_rows, _round_up(batch, 8))
    # v7x has 2 TensorCores; give the "parallel" grid axis at least 2 steps
    # when the batch allows it so both cores stream rows (no-op on v5e/v6e).
    if pl.cdiv(batch, tb) < 2 and batch > 8:
        tb = _round_up(pl.cdiv(batch, 2), 8)
    return tb


def _mlp_block(x, w1, b1, w2, b2, out_dtype):
    """relu(x @ w1 + b1) @ w2 + b2 with f32 accumulation and f32 epilogue."""
    h = jnp.dot(x, w1, preferred_element_type=jnp.float32)
    h = jnp.maximum(h + b1, 0.0)                       # bias + ReLU in f32
    h = h.astype(w2.dtype)                             # no-op for f32 weights
    out = jnp.dot(h, w2, preferred_element_type=jnp.float32)
    return (out + b2).astype(out_dtype)


def _mlp1_kernel(x_ref, w1_ref, b1_ref, w2_ref, b2_ref, o_ref):
    o_ref[...] = _mlp_block(x_ref[...], w1_ref[...], b1_ref[...],
                            w2_ref[...], b2_ref[...], o_ref.dtype)


def _mlp2_kernel(q_ref, d_ref, w1_ref, b1_ref, w2_ref, b2_ref, qo_ref, do_ref):
    # Weights/biases are resident (same block every grid step); load once.
    w1 = w1_ref[...]
    b1 = b1_ref[...]
    w2 = w2_ref[...]
    b2 = b2_ref[...]
    qo_ref[...] = _mlp_block(q_ref[...], w1, b1, w2, b2, qo_ref.dtype)
    do_ref[...] = _mlp_block(d_ref[...], w1, b1, w2, b2, do_ref.dtype)


def prepare_params(w1, b1, w2, b2, *, compute_dtype=jnp.float32):
    """One-time weight preparation (call at module init, not per forward).

    Matmul weights are cast to `compute_dtype` (bf16 opt-in halves HBM traffic
    and uses the native bf16 MXU path); biases stay f32 for the f32 epilogue.
    """
    return (w1.astype(compute_dtype), b1.astype(jnp.float32),
            w2.astype(compute_dtype), b2.astype(jnp.float32))


def _cost(total_rows, in_dim, hidden, emb_out, act_dtype, w_dtype, out_dtype,
          w1, b1, w2, b2):
    act_isz = jnp.dtype(act_dtype).itemsize
    w_isz = jnp.dtype(w_dtype).itemsize
    out_isz = jnp.dtype(out_dtype).itemsize
    flops = 2 * total_rows * (in_dim * hidden + hidden * emb_out)
    bytes_accessed = (total_rows * in_dim * act_isz
                      + total_rows * emb_out * out_isz
                      + (w1.size + w2.size) * w_isz
                      + (b1.size + b2.size) * 4)
    return pl.CostEstimate(flops=flops, transcendentals=0,
                           bytes_accessed=bytes_accessed)


def embedding_head_forward(x, params, *, block_rows=2048):
    """Single-stream MLP head: relu(x @ w1 + b1) @ w2 + b2."""
    w1, b1, w2, b2 = params
    out_dtype = x.dtype
    x = x.astype(w1.dtype)                    # no-op for the default f32 path
    batch, in_dim = x.shape
    hidden = w1.shape[1]
    emb_out = w2.shape[1]
    tb = _choose_tile(batch, block_rows)

    return pl.pallas_call(
        _mlp1_kernel,
        out_shape=jax.ShapeDtypeStruct((batch, emb_out), out_dtype),
        grid=(pl.cdiv(batch, tb),),
        in_specs=[
            pl.BlockSpec((tb, in_dim), lambda i: (i, 0)),     # activation stream
            pl.BlockSpec((in_dim, hidden), lambda i: (0, 0)), # resident weights
            pl.BlockSpec((1, hidden), lambda i: (0, 0)),
            pl.BlockSpec((hidden, emb_out), lambda i: (0, 0)),
            pl.BlockSpec((1, emb_out), lambda i: (0, 0)),
        ],
        out_specs=pl.BlockSpec((tb, emb_out), lambda i: (i, 0)),
        compiler_params=pltpu.CompilerParams(
            dimension_semantics=("parallel",)),
        cost_estimate=_cost(batch, in_dim, hidden, emb_out,
                            x.dtype, w1.dtype, out_dtype, w1, b1, w2, b2),
    )(x, w1, b1, w2, b2)


def embedding_head_inference(query, doc, params, *, block_rows=2048):
    """Inference path of EmbeddingHead.forward -> (query_emb, doc_emb).

    query and doc with matching batch are processed by ONE pallas_call (two
    input streams, two output streams, weights loaded from HBM once); no
    wrapper concat/pad copies.  Mismatched batches fall back to two calls.
    """
    if query.shape[0] != doc.shape[0]:
        return (embedding_head_forward(query, params, block_rows=block_rows),
                embedding_head_forward(doc, params, block_rows=block_rows))

    w1, b1, w2, b2 = params
    out_dtype = query.dtype
    q = query.astype(w1.dtype)
    d = doc.astype(w1.dtype)
    batch, in_dim = q.shape
    hidden = w1.shape[1]
    emb_out = w2.shape[1]
    tb = _choose_tile(batch, block_rows)

    row_in = pl.BlockSpec((tb, in_dim), lambda i: (i, 0))
    row_out = pl.BlockSpec((tb, emb_out), lambda i: (i, 0))

    q_out, d_out = pl.pallas_call(
        _mlp2_kernel,
        out_shape=(jax.ShapeDtypeStruct((batch, emb_out), out_dtype),
                   jax.ShapeDtypeStruct((batch, emb_out), out_dtype)),
        grid=(pl.cdiv(batch, tb),),
        in_specs=[
            row_in,                                           # query stream
            row_in,                                           # doc stream
            pl.BlockSpec((in_dim, hidden), lambda i: (0, 0)), # resident weights
            pl.BlockSpec((1, hidden), lambda i: (0, 0)),
            pl.BlockSpec((hidden, emb_out), lambda i: (0, 0)),
            pl.BlockSpec((1, emb_out), lambda i: (0, 0)),
        ],
        out_specs=(row_out, row_out),
        compiler_params=pltpu.CompilerParams(
            dimension_semantics=("parallel",)),
        cost_estimate=_cost(2 * batch, in_dim, hidden, emb_out,
                            q.dtype, w1.dtype, out_dtype, w1, b1, w2, b2),
    )(q, d, w1, b1, w2, b2)
    return q_out, d_out


def reference_forward(x, w1, b1, w2, b2):
    h = jnp.maximum(x.astype(jnp.float32) @ w1.astype(jnp.float32) + b1, 0.0)
    return h @ w2.astype(jnp.float32) + b2


if __name__ == "__main__":
    key = jax.random.PRNGKey(0)
    k_q, k_d, k_w1, k_b1, k_w2, k_b2 = jax.random.split(key, 6)

    batch = 8
    query = jax.random.normal(k_q, (batch, EMB_IN), dtype=jnp.float32)
    doc = jax.random.normal(k_d, (batch, EMB_IN), dtype=jnp.float32)

    # Deterministic parameter init (PyTorch Linear-style uniform bounds).
    bound1 = 1.0 / (EMB_IN ** 0.5)
    w1 = jax.random.uniform(k_w1, (EMB_IN, HIDDEN), jnp.float32, -bound1, bound1)
    b1 = jax.random.uniform(k_b1, (1, HIDDEN), jnp.float32, -bound1, bound1)
    bound2 = 1.0 / (HIDDEN ** 0.5)
    w2 = jax.random.uniform(k_w2, (HIDDEN, EMB_OUT), jnp.float32, -bound2, bound2)
    b2 = jax.random.uniform(k_b2, (1, EMB_OUT), jnp.float32, -bound2, bound2)

    q_ref = reference_forward(query, w1, b1, w2, b2)
    d_ref = reference_forward(doc, w1, b1, w2, b2)

    # --- f32 path (default): fused query+doc, single launch -----------------
    params_f32 = prepare_params(w1, b1, w2, b2)
    q_out, d_out = embedding_head_inference(query, doc, params_f32)
    jax.block_until_ready((q_out, d_out))
    assert q_out.shape == (batch, EMB_OUT) and d_out.shape == (batch, EMB_OUT)
    assert jnp.allclose(q_out, q_ref, atol=1e-5, rtol=1e-5)
    assert jnp.allclose(d_out, d_ref, atol=1e-5, rtol=1e-5)

    # --- multi-tile / ragged-grid check (forces grid=3, partial last tile) --
    big = 20
    qb = jax.random.normal(k_q, (big, EMB_IN), dtype=jnp.float32)
    db = jax.random.normal(k_d, (big, EMB_IN), dtype=jnp.float32)
    qb_out, db_out = embedding_head_inference(qb, db, params_f32, block_rows=8)
    jax.block_until_ready((qb_out, db_out))
    assert jnp.allclose(qb_out, reference_forward(qb, w1, b1, w2, b2),
                        atol=1e-5, rtol=1e-5)
    assert jnp.allclose(db_out, reference_forward(db, w1, b1, w2, b2),
                        atol=1e-5, rtol=1e-5)

    # --- opt-in bf16 activation/weight path (f32 accumulate + epilogue) -----
    params_bf16 = prepare_params(w1, b1, w2, b2, compute_dtype=jnp.bfloat16)
    q_bf, d_bf = embedding_head_inference(query, doc, params_bf16)
    jax.block_until_ready((q_bf, d_bf))
    assert jnp.allclose(q_bf, q_ref, atol=2e-2, rtol=2e-2)
    assert jnp.allclose(d_bf, d_ref, atol=2e-2, rtol=2e-2)

    # TODO(synk): training path (pe/ne tensor lists + dropout) is the same MLP
    # applied per list element with a dropout mask; not a distinct kernel.
    print("KERNEL_OK")
</pallas_src>

<mosaic_0001>
module attributes {stable_mosaic.version = 11 : i64} {
  func.func @_mlp2_kernel(%arg0: i32, %arg1: memref<8x32xf32, #tpu.memory_space<vmem>>, %arg2: memref<8x32xf32, #tpu.memory_space<vmem>>, %arg3: memref<32x32xf32, #tpu.memory_space<vmem>>, %arg4: memref<1x32xf32, #tpu.memory_space<vmem>>, %arg5: memref<32x16xf32, #tpu.memory_space<vmem>>, %arg6: memref<1x16xf32, #tpu.memory_space<vmem>>, %arg7: memref<8x16xf32, #tpu.memory_space<vmem>>, %arg8: memref<8x16xf32, #tpu.memory_space<vmem>>) attributes {dimension_semantics = [#tpu.dimension_semantics<parallel>], iteration_bounds = array<i64: 1>, scalar_prefetch = 0 : i64, scratch_operands = 0 : i64, tpu.core_type = #tpu.core_type<tc>, window_params = [{transform_indices = @transform_0, window_bounds = array<i64: 8, 32>}, {transform_indices = @transform_1, window_bounds = array<i64: 8, 32>}, {pipeline_mode = #tpu.pipeline_mode<synchronous>, transform_indices = @transform_2, window_bounds = array<i64: 32, 32>}, {pipeline_mode = #tpu.pipeline_mode<synchronous>, transform_indices = @transform_3, window_bounds = array<i64: 1, 32>}, {pipeline_mode = #tpu.pipeline_mode<synchronous>, transform_indices = @transform_4, window_bounds = array<i64: 32, 16>}, {pipeline_mode = #tpu.pipeline_mode<synchronous>, transform_indices = @transform_5, window_bounds = array<i64: 1, 16>}, {transform_indices = @transform_6, window_bounds = array<i64: 8, 16>}, {transform_indices = @transform_7, window_bounds = array<i64: 8, 16>}]} {
    %c0 = arith.constant 0 : index
    %c0_0 = arith.constant 0 : index
    %0 = vector.load %arg3[%c0, %c0_0] : memref<32x32xf32, #tpu.memory_space<vmem>>, vector<32x32xf32>
    %c0_1 = arith.constant 0 : index
    %c0_2 = arith.constant 0 : index
    %1 = vector.load %arg4[%c0_1, %c0_2] : memref<1x32xf32, #tpu.memory_space<vmem>>, vector<1x32xf32>
    %c0_3 = arith.constant 0 : index
    %c0_4 = arith.constant 0 : index
    %2 = vector.load %arg5[%c0_3, %c0_4] : memref<32x16xf32, #tpu.memory_space<vmem>>, vector<32x16xf32>
    %c0_5 = arith.constant 0 : index
    %c0_6 = arith.constant 0 : index
    %3 = vector.load %arg6[%c0_5, %c0_6] : memref<1x16xf32, #tpu.memory_space<vmem>>, vector<1x16xf32>
    %c0_7 = arith.constant 0 : index
    %c0_8 = arith.constant 0 : index
    %4 = vector.load %arg1[%c0_7, %c0_8] : memref<8x32xf32, #tpu.memory_space<vmem>>, vector<8x32xf32>
    %cst = arith.constant dense<0.000000e+00> : vector<8x32xf32>
    %5 = tpu.matmul %4, %0, %cst {dimension_numbers = #tpu.dot_dimension_numbers<[1], [0], [0], [1], [0, 0, 1, 1], [], []>} : vector<8x32xf32>, vector<32x32xf32>, vector<8x32xf32> -> vector<8x32xf32>
    %6 = vector.broadcast %1 : vector<1x32xf32> to vector<8x32xf32>
    %7 = arith.addf %5, %6 : vector<8x32xf32>
    %cst_9 = arith.constant 0.000000e+00 : f32
    %8 = vector.broadcast %cst_9 : f32 to vector<8x32xf32>
    %9 = arith.maximumf %7, %8 : vector<8x32xf32>
    %cst_10 = arith.constant dense<0.000000e+00> : vector<8x16xf32>
    %10 = tpu.matmul %9, %2, %cst_10 {dimension_numbers = #tpu.dot_dimension_numbers<[1], [0], [0], [1], [0, 0, 1, 1], [], []>} : vector<8x32xf32>, vector<32x16xf32>, vector<8x16xf32> -> vector<8x16xf32>
    %11 = vector.broadcast %3 : vector<1x16xf32> to vector<8x16xf32>
    %12 = arith.addf %10, %11 : vector<8x16xf32>
    %c0_11 = arith.constant 0 : index
    %c0_12 = arith.constant 0 : index
    %13 = vector.load %arg7[%c0_11, %c0_12] : memref<8x16xf32, #tpu.memory_space<vmem>>, vector<8x16xf32>
    tpu.vector_store %arg7[%c0_11, %c0_12], %12 {strides = array<i32>} : memref<8x16xf32, #tpu.memory_space<vmem>>, vector<8x16xf32>,
    %c0_13 = arith.constant 0 : index
    %c0_14 = arith.constant 0 : index
    %14 = vector.load %arg2[%c0_13, %c0_14] : memref<8x32xf32, #tpu.memory_space<vmem>>, vector<8x32xf32>
    %cst_15 = arith.constant dense<0.000000e+00> : vector<8x32xf32>
    %15 = tpu.matmul %14, %0, %cst_15 {dimension_numbers = #tpu.dot_dimension_numbers<[1], [0], [0], [1], [0, 0, 1, 1], [], []>} : vector<8x32xf32>, vector<32x32xf32>, vector<8x32xf32> -> vector<8x32xf32>
    %16 = vector.broadcast %1 : vector<1x32xf32> to vector<8x32xf32>
    %17 = arith.addf %15, %16 : vector<8x32xf32>
    %cst_16 = arith.constant 0.000000e+00 : f32
    %18 = vector.broadcast %cst_16 : f32 to vector<8x32xf32>
    %19 = arith.maximumf %17, %18 : vector<8x32xf32>
    %cst_17 = arith.constant dense<0.000000e+00> : vector<8x16xf32>
    %20 = tpu.matmul %19, %2, %cst_17 {dimension_numbers = #tpu.dot_dimension_numbers<[1], [0], [0], [1], [0, 0, 1, 1], [], []>} : vector<8x32xf32>, vector<32x16xf32>, vector<8x16xf32> -> vector<8x16xf32>
    %21 = vector.broadcast %3 : vector<1x16xf32> to vector<8x16xf32>
    %22 = arith.addf %20, %21 : vector<8x16xf32>
    %c0_18 = arith.constant 0 : index
    %c0_19 = arith.constant 0 : index
    %23 = vector.load %arg8[%c0_18, %c0_19] : memref<8x16xf32, #tpu.memory_space<vmem>>, vector<8x16xf32>
    tpu.vector_store %arg8[%c0_18, %c0_19], %22 {strides = array<i32>} : memref<8x16xf32, #tpu.memory_space<vmem>>, vector<8x16xf32>,
    return
  }
  func.func @transform_0(%arg0: i32) -> (i32, i32) {
    %c0_i32 = arith.constant 0 : i32
    %c0_i32_0 = arith.constant 0 : i32
    return %arg0, %c0_i32 : i32, i32
  }
  func.func @transform_1(%arg0: i32) -> (i32, i32) {
    %c0_i32 = arith.constant 0 : i32
    %c0_i32_0 = arith.constant 0 : i32
    return %arg0, %c0_i32 : i32, i32
  }
  func.func @transform_2(%arg0: i32) -> (i32, i32) {
    %c0_i32 = arith.constant 0 : i32
    %c0_i32_0 = arith.constant 0 : i32
    %c0_i32_1 = arith.constant 0 : i32
    return %c0_i32, %c0_i32_0 : i32, i32
  }
  func.func @transform_3(%arg0: i32) -> (i32, i32) {
    %c0_i32 = arith.constant 0 : i32
    %c0_i32_0 = arith.constant 0 : i32
    %c0_i32_1 = arith.constant 0 : i32
    return %c0_i32, %c0_i32_0 : i32, i32
  }
  func.func @transform_4(%arg0: i32) -> (i32, i32) {
    %c0_i32 = arith.constant 0 : i32
    %c0_i32_0 = arith.constant 0 : i32
    %c0_i32_1 = arith.constant 0 : i32
    return %c0_i32, %c0_i32_0 : i32, i32
  }
  func.func @transform_5(%arg0: i32) -> (i32, i32) {
    %c0_i32 = arith.constant 0 : i32
    %c0_i32_0 = arith.constant 0 : i32
    %c0_i32_1 = arith.constant 0 : i32
    return %c0_i32, %c0_i32_0 : i32, i32
  }
  func.func @transform_6(%arg0: i32) -> (i32, i32) {
    %c0_i32 = arith.constant 0 : i32
    %c0_i32_0 = arith.constant 0 : i32
    return %arg0, %c0_i32 : i32, i32
  }
  func.func @transform_7(%arg0: i32) -> (i32, i32) {
    %c0_i32 = arith.constant 0 : i32
    %c0_i32_0 = arith.constant 0 : i32
    return %arg0, %c0_i32 : i32, i32
  }
}

</mosaic_0001>

<llo_original>
// kernel: tpu_custom_call.1
$region0: #{tpu_custom_call.1}
  #allocation0 [shape = 'u32[]', space=smem, size = 0x4, offset = 0x4, fixed_abs, tag = 'smem constant byte address 0x4 - core index']
  #allocation1 [shape = 'u32[144,128]{1,0:T(1,128)}', space=vmem, size = 0x12000, scoped, tag = 'internal scratch']
  %s0 = inlined_call_operand.vmem [shape: f32[8,32], index: 0, kind: input, shape index: {}]
  %s1 = inlined_call_operand.vmem [shape: f32[8,32], index: 1, kind: input, shape index: {}]
  %s2 = inlined_call_operand.vmem [shape: f32[32,32], index: 2, kind: input, shape index: {}]
  %s3 = inlined_call_operand.vmem [shape: f32[1,32], index: 3, kind: input, shape index: {}]
  %s4 = inlined_call_operand.vmem [shape: f32[32,16], index: 4, kind: input, shape index: {}]
  %s5 = inlined_call_operand.vmem [shape: f32[1,16], index: 5, kind: input, shape index: {}]
  %s6 = inlined_call_operand.hbm [shape: f32[8,16], index: 6, kind: output, shape index: {0}]
  %s7 = inlined_call_operand.hbm [shape: f32[8,16], index: 7, kind: output, shape index: {1}]
  %8 = xla_tuple %s6, %s7
  %s9 = sld [smem:[#allocation0]]
  $region42: #{tpu_custom_call.1} parent=0
    _
  %s11 = ssub.s32 1, %s9
  %s12 = scalar_select 0, %s11, %s9
  $region1: #{tpu_custom_call.1} parent=0
    #allocation2 [shape = 'u8[4096]{0}', space=vmem, size = 0x1000, scoped, tag = 'output window, operand 0, single buffered']
    #allocation3 [shape = 's32[1]{0}', space=sflag, size = 0x4, scoped, tag = 'scoped memory for tpu_custom_call.1']
    #allocation4 [shape = 'u8[4096]{0}', space=vmem, size = 0x1000, scoped, tag = 'output window, operand 1, single buffered']
    #allocation5 [shape = 's32[1]{0}', space=sflag, size = 0x4, scoped, tag = 'scoped memory for tpu_custom_call.1']
    %13 = vsyncpa [#allocation3], 0
    %14 = vsyncpa [#allocation5], 0
    // Predicated region
    $region2: #{tpu_custom_call.1} parent=1 // pred_check
      _
    $region3: #{tpu_custom_call.1} parent=1 // pred_check_branch
      %16 = sbr.rel (0) target = $region5
    $region4: #{tpu_custom_call.1} parent=1 // pred_region
      _
    $region5: #{tpu_custom_call.1} parent=1 // pred_fallthru
      _
    // Predicated region
    $region6: #{tpu_custom_call.1} parent=1 // pred_check
      _
    $region7: #{tpu_custom_call.1} parent=1 // pred_check_branch
      %18 = sbr.rel (0) target = $region9
    $region8: #{tpu_custom_call.1} parent=1 // pred_region
      _
    $region9: #{tpu_custom_call.1} parent=1 // pred_fallthru
      _
    // Predicated region
    $region10: #{tpu_custom_call.1} parent=1 // pred_check
      _
    $region11: #{tpu_custom_call.1} parent=1 // pred_check_branch
      %20 = sbr.rel (0) target = $region13
    $region12: #{tpu_custom_call.1} parent=1 // pred_region
      _
    $region13: #{tpu_custom_call.1} parent=1 // pred_fallthru
      _
    // Predicated region
    $region14: #{tpu_custom_call.1} parent=1 // pred_check
      _
    $region15: #{tpu_custom_call.1} parent=1 // pred_check_branch
      %22 = sbr.rel (0) target = $region17
    $region16: #{tpu_custom_call.1} parent=1 // pred_region
      _
    $region17: #{tpu_custom_call.1} parent=1 // pred_fallthru
      _
    // Predicated region
    $region18: #{tpu_custom_call.1} parent=1 // pred_check
      _
    $region19: #{tpu_custom_call.1} parent=1 // pred_check_branch
      %24 = sbr.rel (0) target = $region21
    $region20: #{tpu_custom_call.1} parent=1 // pred_region
      _
    $region21: #{tpu_custom_call.1} parent=1 // pred_fallthru
      _
    // Predicated region
    $region22: #{tpu_custom_call.1} parent=1 // pred_check
      _
    $region23: #{tpu_custom_call.1} parent=1 // pred_check_branch
      %26 = sbr.rel (0) target = $region25
    $region24: #{tpu_custom_call.1} parent=1 // pred_region
      _
    $region25: #{tpu_custom_call.1} parent=1 // pred_fallthru
      _
    %v27 = vld [vmem:[%s2] sm:$0xff]
    %v28 = vld [vmem:[%s2 + $0x8] sm:$0xff]
    %v29 = vld [vmem:[%s2 + $0x10] sm:$0xff]
    %v30 = vld [vmem:[%s2 + $0x18] sm:$0xff]
    %v31 = vld [vmem:[%s3] sm:$0x1]
    %v32 = vld [vmem:[%s4] sm:$0xff]
    %v33 = vld [vmem:[%s4 + $0x8] sm:$0xff]
    %v34 = vld [vmem:[%s4 + $0x10] sm:$0xff]
    %v35 = vld [vmem:[%s4 + $0x18] sm:$0xff]
    %v36 = vld [vmem:[%s5] sm:$0x1]
    %v37 = vld [vmem:[%s0] sm:$0xff]
    %v39 = vlaneseq
    %v40 = vshrl.u32 %v39, 7
    %v41 = vsub.s32 0, %v40
    %v42 = vrot.slane %v31, %v41
    %vm44 = vcmask 261120
    %v46 = vsel %vm44, %v37, 0
    %48 = vmatprep.subr.mxu0 0.0
    %49 = vmatpush1.msra.mxu0 %v27
    %50 = vmatprep.subr.mxu0 0.0
    %51 = vmatpush1.msra.mxu0 %v28
    %52 = vmatprep.subr.mxu0 0.0
    %53 = vmatpush1.msra.mxu0 %v29
    %54 = vmatprep.subr.mxu0 0.0
    %55 = vmatpush1.msra.mxu0 %v30
    %56 = vmatprep.subr.mxu0 0.0
    %57 = vmatpush1.msra.mxu0 0.0
    %58 = vmatprep.subr.mxu0 0.0
    %59 = vmatpush1.msra.mxu0 0.0
    %60 = vmatprep.subr.mxu0 0.0
    %61 = vmatpush1.msra.mxu0 0.0
    %62 = vmatprep.subr.mxu0 0.0
    %63 = vmatpush1.msra.mxu0 0.0
    %64 = vmatprep.subr.mxu0 0.0
    %65 = vmatpush1.msra.mxu0 0.0
    %66 = vmatprep.subr.mxu0 0.0
    %67 = vmatpush1.msra.mxu0 0.0
    %68 = vmatprep.subr.mxu0 0.0
    %69 = vmatpush1.msra.mxu0 0.0
    %70 = vmatprep.subr.mxu0 0.0
    %71 = vmatpush1.msra.mxu0 0.0
    %72 = vmatprep.subr.mxu0 0.0
    %73 = vmatpush1.msra.mxu0 0.0
    %74 = vmatprep.subr.mxu0 0.0
    %75 = vmatpush1.msra.mxu0 0.0
    %76 = vmatprep.subr.mxu0 0.0
    %77 = vmatpush1.msra.mxu0 0.0
    %78 = vmatprep.subr.mxu0 0.0
    %79 = vmatpush1.msra.mxu0 0.0
    %80 = vmatprep.subr.mxu0 0.0
    %81 = vmatpush1.msra.mxu0 0.0
    %82 = vmatprep.subr.mxu0 0.0
    %83 = vmatpush1.msra.mxu0 0.0
    %84 = vmatprep.subr.mxu0 0.0
    %85 = vmatpush1.msra.mxu0 0.0
    %86 = vmatprep.subr.mxu0 0.0
    %87 = vmatpush1.msra.mxu0 0.0
    %88 = vmatprep.subr.mxu0 0.0
    %89 = vmatpush1.msra.mxu0 0.0
    %90 = vmatprep.subr.mxu0 0.0
    %91 = vmatpush1.msra.mxu0 0.0
    %92 = vmatprep.subr.mxu0 0.0
    %93 = vmatpush1.msra.mxu0 0.0
    %94 = vmatprep.subr.mxu0 0.0
    %95 = vmatpush1.msra.mxu0 0.0
    %96 = vmatprep.subr.mxu0 0.0
    %97 = vmatpush1.msra.mxu0 0.0
    %98 = vmatprep.subr.mxu0 0.0
    %99 = vmatpush1.msra.mxu0 0.0
    %100 = vmatprep.subr.mxu0 0.0
    %101 = vmatpush1.msra.mxu0 0.0
    %102 = vmatprep.subr.mxu0 0.0
    %103 = vmatpush1.msra.mxu0 0.0
    %104 = vmatprep.subr.mxu0 0.0
    %105 = vmatpush1.msra.mxu0 0.0
    %106 = vmatprep.subr.mxu0 0.0
    %107 = vmatpush1.msra.mxu0 0.0
    %108 = vmatprep.subr.mxu0 0.0
    %109 = vmatpush1.msra.mxu0 0.0
    %110 = vmatprep.subr.mxu0 0.0
    %111 = vmatpush1.msra.mxu0 0.0
    %112 = vmatprep.mubr.f32.mxu0 0.0
    %113 = vmatmul.mubr.f32.gmra.mrb[0].mxu0 %v46
    %v114 = vpop.f32.mrb[0].mxu0
    %v115 = vadd.f32 %v42, %v114
    %v116 = vpop.f32.mrb[0].mxu0
    %117 = vdwg.mxu0
    %v118 = vmax.f32 %v115, 0.0
    %v120 = vlaneseq
    %v121 = vshrl.u32 %v120, 7
    %v122 = vsub.s32 0, %v121
    %v123 = vrot.slane %v36, %v122
    %v126 = vsel %vm44, %v118, 0
    %128 = vmatprep.subr.mxu0 0.0
    %129 = vmatpush1.msra.mxu0 %v32
    %130 = vmatprep.subr.mxu0 0.0
    %131 = vmatpush1.msra.mxu0 %v33
    %132 = vmatprep.subr.mxu0 0.0
    %133 = vmatpush1.msra.mxu0 %v34
    %134 = vmatprep.subr.mxu0 0.0
    %135 = vmatpush1.msra.mxu0 %v35
    %136 = vmatprep.subr.mxu0 0.0
    %137 = vmatpush1.msra.mxu0 0.0
    %138 = vmatprep.subr.mxu0 0.0
    %139 = vmatpush1.msra.mxu0 0.0
    %140 = vmatprep.subr.mxu0 0.0
    %141 = vmatpush1.msra.mxu0 0.0
    %142 = vmatprep.subr.mxu0 0.0
    %143 = vmatpush1.msra.mxu0 0.0
    %144 = vmatprep.subr.mxu0 0.0
    %145 = vmatpush1.msra.mxu0 0.0
    %146 = vmatprep.subr.mxu0 0.0
    %147 = vmatpush1.msra.mxu0 0.0
    %148 = vmatprep.subr.mxu0 0.0
    %149 = vmatpush1.msra.mxu0 0.0
    %150 = vmatprep.subr.mxu0 0.0
    %151 = vmatpush1.msra.mxu0 0.0
    %152 = vmatprep.subr.mxu0 0.0
    %153 = vmatpush1.msra.mxu0 0.0
    %154 = vmatprep.subr.mxu0 0.0
    %155 = vmatpush1.msra.mxu0 0.0
    %156 = vmatprep.subr.mxu0 0.0
    %157 = vmatpush1.msra.mxu0 0.0
    %158 = vmatprep.subr.mxu0 0.0
    %159 = vmatpush1.msra.mxu0 0.0
    %160 = vmatprep.subr.mxu0 0.0
    %161 = vmatpush1.msra.mxu0 0.0
    %162 = vmatprep.subr.mxu0 0.0
    %163 = vmatpush1.msra.mxu0 0.0
    %164 = vmatprep.subr.mxu0 0.0
    %165 = vmatpush1.msra.mxu0 0.0
    %166 = vmatprep.subr.mxu0 0.0
    %167 = vmatpush1.msra.mxu0 0.0
    %168 = vmatprep.subr.mxu0 0.0
    %169 = vmatpush1.msra.mxu0 0.0
    %170 = vmatprep.subr.mxu0 0.0
    %171 = vmatpush1.msra.mxu0 0.0
    %172 = vmatprep.subr.mxu0 0.0
    %173 = vmatpush1.msra.mxu0 0.0
    %174 = vmatprep.subr.mxu0 0.0
    %175 = vmatpush1.msra.mxu0 0.0
    %176 = vmatprep.subr.mxu0 0.0
    %177 = vmatpush1.msra.mxu0 0.0
    %178 = vmatprep.subr.mxu0 0.0
    %179 = vmatpush1.msra.mxu0 0.0
    %180 = vmatprep.subr.mxu0 0.0
    %181 = vmatpush1.msra.mxu0 0.0
    %182 = vmatprep.subr.mxu0 0.0
    %183 = vmatpush1.msra.mxu0 0.0
    %184 = vmatprep.subr.mxu0 0.0
    %185 = vmatpush1.msra.mxu0 0.0
    %186 = vmatprep.subr.mxu0 0.0
    %187 = vmatpush1.msra.mxu0 0.0
    %188 = vmatprep.subr.mxu0 0.0
    %189 = vmatpush1.msra.mxu0 0.0
    %190 = vmatprep.subr.mxu0 0.0
    %191 = vmatpush1.msra.mxu0 0.0
    %192 = vmatprep.mubr.f32.mxu0 0.0
    %193 = vmatmul.mubr.f32.gmra.mrb[0].mxu0 %v126
    %v194 = vpop.f32.mrb[0].mxu0
    %v195 = vadd.f32 %v123, %v194
    %v196 = vpop.f32.mrb[0].mxu0
    %197 = vdwg.mxu0
    %vm198 = vcmask 130048
    %199 = vst.msk [vmem:[#allocation2] sm:$0xff] %vm198, %v195
    %v200 = vld [vmem:[%s1] sm:$0xff]
    %v202 = vsel %vm44, %v200, 0
    %204 = vmatprep.subr.mxu0 0.0
    %205 = vmatpush1.msra.mxu0 %v27
    %206 = vmatprep.subr.mxu0 0.0
    %207 = vmatpush1.msra.mxu0 %v28
    %208 = vmatprep.subr.mxu0 0.0
    %209 = vmatpush1.msra.mxu0 %v29
    %210 = vmatprep.subr.mxu0 0.0
    %211 = vmatpush1.msra.mxu0 %v30
    %212 = vmatprep.subr.mxu0 0.0
    %213 = vmatpush1.msra.mxu0 0.0
    %214 = vmatprep.subr.mxu0 0.0
    %215 = vmatpush1.msra.mxu0 0.0
    %216 = vmatprep.subr.mxu0 0.0
    %217 = vmatpush1.msra.mxu0 0.0
    %218 = vmatprep.subr.mxu0 0.0
    %219 = vmatpush1.msra.mxu0 0.0
    %220 = vmatprep.subr.mxu0 0.0
    %221 = vmatpush1.msra.mxu0 0.0
    %222 = vmatprep.subr.mxu0 0.0
    %223 = vmatpush1.msra.mxu0 0.0
    %224 = vmatprep.subr.mxu0 0.0
    %225 = vmatpush1.msra.mxu0 0.0
    %226 = vmatprep.subr.mxu0 0.0
    %227 = vmatpush1.msra.mxu0 0.0
    %228 = vmatprep.subr.mxu0 0.0
    %229 = vmatpush1.msra.mxu0 0.0
    %230 = vmatprep.subr.mxu0 0.0
    %231 = vmatpush1.msra.mxu0 0.0
    %232 = vmatprep.subr.mxu0 0.0
    %233 = vmatpush1.msra.mxu0 0.0
    %234 = vmatprep.subr.mxu0 0.0
    %235 = vmatpush1.msra.mxu0 0.0
    %236 = vmatprep.subr.mxu0 0.0
    %237 = vmatpush1.msra.mxu0 0.0
    %238 = vmatprep.subr.mxu0 0.0
    %239 = vmatpush1.msra.mxu0 0.0
    %240 = vmatprep.subr.mxu0 0.0
    %241 = vmatpush1.msra.mxu0 0.0
    %242 = vmatprep.subr.mxu0 0.0
    %243 = vmatpush1.msra.mxu0 0.0
    %244 = vmatprep.subr.mxu0 0.0
    %245 = vmatpush1.msra.mxu0 0.0
    %246 = vmatprep.subr.mxu0 0.0
    %247 = vmatpush1.msra.mxu0 0.0
    %248 = vmatprep.subr.mxu0 0.0
    %249 = vmatpush1.msra.mxu0 0.0
    %250 = vmatprep.subr.mxu0 0.0
    %251 = vmatpush1.msra.mxu0 0.0
    %252 = vmatprep.subr.mxu0 0.0
    %253 = vmatpush1.msra.mxu0 0.0
    %254 = vmatprep.subr.mxu0 0.0
    %255 = vmatpush1.msra.mxu0 0.0
    %256 = vmatprep.subr.mxu0 0.0
    %257 = vmatpush1.msra.mxu0 0.0
    %258 = vmatprep.subr.mxu0 0.0
    %259 = vmatpush1.msra.mxu0 0.0
    %260 = vmatprep.subr.mxu0 0.0
    %261 = vmatpush1.msra.mxu0 0.0
    %262 = vmatprep.subr.mxu0 0.0
    %263 = vmatpush1.msra.mxu0 0.0
    %264 = vmatprep.subr.mxu0 0.0
    %265 = vmatpush1.msra.mxu0 0.0
    %266 = vmatprep.subr.mxu0 0.0
    %267 = vmatpush1.msra.mxu0 0.0
    %268 = vmatprep.mubr.f32.mxu0 0.0
    %269 = vmatmul.mubr.f32.gmra.mrb[0].mxu0 %v202
    %v270 = vpop.f32.mrb[0].mxu0
    %v271 = vadd.f32 %v42, %v270
    %v272 = vpop.f32.mrb[0].mxu0
    %273 = vdwg.mxu0
    %v274 = vmax.f32 %v271, 0.0
    %v276 = vsel %vm44, %v274, 0
    %278 = vmatprep.subr.mxu0 0.0
    %279 = vmatpush1.msra.mxu0 %v32
    %280 = vmatprep.subr.mxu0 0.0
    %281 = vmatpush1.msra.mxu0 %v33
    %282 = vmatprep.subr.mxu0 0.0
    %283 = vmatpush1.msra.mxu0 %v34
    %284 = vmatprep.subr.mxu0 0.0
    %285 = vmatpush1.msra.mxu0 %v35
    %286 = vmatprep.subr.mxu0 0.0
    %287 = vmatpush1.msra.mxu0 0.0
    %288 = vmatprep.subr.mxu0 0.0
    %289 = vmatpush1.msra.mxu0 0.0
    %290 = vmatprep.subr.mxu0 0.0
    %291 = vmatpush1.msra.mxu0 0.0
    %292 = vmatprep.subr.mxu0 0.0
    %293 = vmatpush1.msra.mxu0 0.0
    %294 = vmatprep.subr.mxu0 0.0
    %295 = vmatpush1.msra.mxu0 0.0
    %296 = vmatprep.subr.mxu0 0.0
    %297 = vmatpush1.msra.mxu0 0.0
    %298 = vmatprep.subr.mxu0 0.0
    %299 = vmatpush1.msra.mxu0 0.0
    %300 = vmatprep.subr.mxu0 0.0
    %301 = vmatpush1.msra.mxu0 0.0
    %302 = vmatprep.subr.mxu0 0.0
    %303 = vmatpush1.msra.mxu0 0.0
    %304 = vmatprep.subr.mxu0 0.0
    %305 = vmatpush1.msra.mxu0 0.0
    %306 = vmatprep.subr.mxu0 0.0
    %307 = vmatpush1.msra.mxu0 0.0
    %308 = vmatprep.subr.mxu0 0.0
    %309 = vmatpush1.msra.mxu0 0.0
    %310 = vmatprep.subr.mxu0 0.0
    %311 = vmatpush1.msra.mxu0 0.0
    %312 = vmatprep.subr.mxu0 0.0
    %313 = vmatpush1.msra.mxu0 0.0
    %314 = vmatprep.subr.mxu0 0.0
    %315 = vmatpush1.msra.mxu0 0.0
    %316 = vmatprep.subr.mxu0 0.0
    %317 = vmatpush1.msra.mxu0 0.0
    %318 = vmatprep.subr.mxu0 0.0
    %319 = vmatpush1.msra.mxu0 0.0
    %320 = vmatprep.subr.mxu0 0.0
    %321 = vmatpush1.msra.mxu0 0.0
    %322 = vmatprep.subr.mxu0 0.0
    %323 = vmatpush1.msra.mxu0 0.0
    %324 = vmatprep.subr.mxu0 0.0
    %325 = vmatpush1.msra.mxu0 0.0
    %326 = vmatprep.subr.mxu0 0.0
    %327 = vmatpush1.msra.mxu0 0.0
    %328 = vmatprep.subr.mxu0 0.0
    %329 = vmatpush1.msra.mxu0 0.0
    %330 = vmatprep.subr.mxu0 0.0
    %331 = vmatpush1.msra.mxu0 0.0
    %332 = vmatprep.subr.mxu0 0.0
    %333 = vmatpush1.msra.mxu0 0.0
    %334 = vmatprep.subr.mxu0 0.0
    %335 = vmatpush1.msra.mxu0 0.0
    %336 = vmatprep.subr.mxu0 0.0
    %337 = vmatpush1.msra.mxu0 0.0
    %338 = vmatprep.subr.mxu0 0.0
    %339 = vmatpush1.msra.mxu0 0.0
    %340 = vmatprep.subr.mxu0 0.0
    %341 = vmatpush1.msra.mxu0 0.0
    %342 = vmatprep.mubr.f32.mxu0 0.0
    %343 = vmatmul.mubr.f32.gmra.mrb[0].mxu0 %v276
    %v344 = vpop.f32.mrb[0].mxu0
    %v345 = vadd.f32 %v123, %v344
    %v346 = vpop.f32.mrb[0].mxu0
    %347 = vdwg.mxu0
    %348 = vst.msk [vmem:[#allocation4] sm:$0xff] %vm198, %v345
    // Predicated region
    $region26: #{tpu_custom_call.1} parent=1 // pred_check
      _
    $region27: #{tpu_custom_call.1} parent=1 // pred_check_branch
      %350 = sbr.rel (0) target = $region29
    $region28: #{tpu_custom_call.1} parent=1 // pred_region
      %s352 = ssub.s32 128, 128
      %353 = vsyncadd [#allocation3], %s352
      %s355 = sshll.u32 [#allocation2], 4
      %s356 = int_to_ptr.vmem [resolvable:$true] %s355
      %358 = dma.vmem_to_hbm [thread:$0]  %s356, 128, %s6, [#allocation3]
    $region29: #{tpu_custom_call.1} parent=1 // pred_fallthru
      _
    // Predicated region
    $region30: #{tpu_custom_call.1} parent=1 // pred_check
      _
    $region31: #{tpu_custom_call.1} parent=1 // pred_check_branch
      %360 = sbr.rel (0) target = $region33
    $region32: #{tpu_custom_call.1} parent=1 // pred_region
      %s362 = ssub.s32 128, 128
      %363 = vsyncadd [#allocation5], %s362
      %s365 = sshll.u32 [#allocation4], 4
      %s366 = int_to_ptr.vmem [resolvable:$true] %s365
      %368 = dma.vmem_to_hbm [thread:$0]  %s366, 128, %s7, [#allocation5]
    $region33: #{tpu_custom_call.1} parent=1 // pred_fallthru
      _
    // Predicated region
    $region34: #{tpu_custom_call.1} parent=1 // pred_check
      _
    $region35: #{tpu_custom_call.1} parent=1 // pred_check_branch
      %370 = sbr.rel (0) target = $region37
    $region36: #{tpu_custom_call.1} parent=1 // pred_region
      %371 = dma.done [#allocation3], 128
    $region37: #{tpu_custom_call.1} parent=1 // pred_fallthru
      _
    // Predicated region
    $region38: #{tpu_custom_call.1} parent=1 // pred_check
      _
    $region39: #{tpu_custom_call.1} parent=1 // pred_check_branch
      %373 = sbr.rel (0) target = $region41
    $region40: #{tpu_custom_call.1} parent=1 // pred_region
      %374 = dma.done [#allocation5], 128
    $region41: #{tpu_custom_call.1} parent=1 // pred_fallthru
      _
    %375 = vsyncpa [#allocation3], 1
    %376 = vsyncpa [#allocation5], 1

</llo_original>
